<compile_context>
chip_gen: v7x
topology: tpu7x:2x2x1
jax: 0.10.0
libtpu: 0.0.40
codegen_flags: <defaults>
</compile_context>

<pallas_src>
import functools

import jax
import jax.numpy as jnp
from jax import lax
from jax.experimental import pallas as pl
from jax.experimental.pallas import tpu as pltpu


def _focal_loss_kernel(x_ref, tgt_ref, out_ref, *, gamma, alpha, hw_total,
                       tile_hw, needs_mask):
    j = pl.program_id(1)

    @pl.when(j == 0)
    def _init():
        out_ref[...] = jnp.zeros_like(out_ref)

    x = x_ref[0].astype(jnp.float32)           # (C, T)  classes on sublanes
    t = tgt_ref[0]                             # (1, T)  int32 targets
    C, T = x.shape

    # log-softmax over the class (sublane) axis.
    m = jnp.max(x, axis=0, keepdims=True)                       # (1, T)
    z = x - m
    lse = jnp.log(jnp.sum(jnp.exp(z), axis=0, keepdims=True))   # (1, T)

    # gather(1, target) via a one-hot sublane reduction.
    cls = lax.broadcasted_iota(jnp.int32, (C, T), 0)
    onehot = cls == t                                           # (C, T)
    zt = jnp.sum(jnp.where(onehot, z, 0.0), axis=0, keepdims=True)
    logpt = zt - lse                                            # (1, T)
    pt = jnp.exp(logpt)

    if alpha is not None:
        # alpha[target] via a select chain of scalar literals (no array const).
        at = jnp.zeros_like(logpt)                              # (1, T)
        for c in range(C):
            at = jnp.where(t == c, float(alpha[c]), at)
        logpt = logpt * at

    # clamp: pt = exp(logpt) can round slightly above 1.
    one_m_pt = jnp.maximum(1.0 - pt, 0.0)
    g = float(gamma)
    if g == 0.0:
        focal = jnp.ones_like(pt)
    elif g.is_integer() and 0.0 < g <= 8.0:
        focal = one_m_pt                       # integer gamma: repeated VPU mul
        for _ in range(int(g) - 1):
            focal = focal * one_m_pt
    elif (2.0 * g).is_integer() and 0.0 < g <= 8.0:
        s = jnp.sqrt(one_m_pt)                 # half-integer gamma: sqrt + mul
        focal = s
        for _ in range(int(2.0 * g) - 1):
            focal = focal * s
    else:
        # general float gamma: x**g = exp(g*log(x)), with x == 0 handled.
        safe = jnp.maximum(one_m_pt, 1e-30)
        focal = jnp.where(one_m_pt > 0.0, jnp.exp(g * jnp.log(safe)), 0.0)

    loss = -focal * logpt                                       # (1, T)

    if needs_mask:
        # mask lanes beyond the real H*W extent (tail tile of the cdiv grid).
        lane = lax.broadcasted_iota(jnp.int32, (1, T), 1)
        valid = (j * tile_hw + lane) < hw_total
        loss = jnp.where(valid, loss, 0.0)

    out_ref[...] += loss[None]                 # (1, 1, T) per-lane partial sums


def focal_loss(x_nchw, target_nhw, *, gamma=0.0, alpha=None,
               size_average=True, tile_hw=None):
    """Pallas implementation of FocalLoss.forward((x,), target)."""
    x_nchw = jnp.asarray(x_nchw)
    N, C, H, W = x_nchw.shape
    HW = H * W

    x3 = x_nchw.reshape(N, C, HW)              # native dtype, no transpose
    tgt = jnp.asarray(target_nhw).reshape(N, 1, HW).astype(jnp.int32)

    # alpha handling, as in the PyTorch __init__ (compile-time constants).
    if isinstance(alpha, (float, int)) and not isinstance(alpha, bool):
        alpha_c = (float(alpha), 1.0 - float(alpha))
    elif isinstance(alpha, (list, tuple)):
        alpha_c = tuple(float(a) for a in alpha)
    else:
        alpha_c = None
    if alpha_c is not None:
        assert len(alpha_c) == C, "alpha length must match num classes"

    # Tile sizing: ~2 MiB x-tile (double-buffered) fits the default scoped VMEM
    # on every generation (v5e 16 MiB ... v7x 32/64 MiB) while sitting on the
    # HBM-roofline plateau; tail tiles are masked in-kernel.
    if tile_hw is None:
        target_bytes = 2 * 1024 * 1024
        tile_hw = max(128, (target_bytes // (C * x3.dtype.itemsize)) // 128 * 128)
    if tile_hw >= HW:
        tile_hw = HW                           # single full-extent block
    else:
        tile_hw = max(128, (tile_hw // 128) * 128)   # lane-aligned partial block
    n_hw_blocks = pl.cdiv(HW, tile_hw)
    needs_mask = (HW % tile_hw) != 0

    kernel = functools.partial(
        _focal_loss_kernel,
        gamma=float(gamma),
        alpha=alpha_c,
        hw_total=HW,
        tile_hw=tile_hw,
        needs_mask=needs_mask,
    )

    partial = pl.pallas_call(
        kernel,
        out_shape=jax.ShapeDtypeStruct((N, 1, tile_hw), jnp.float32),
        grid_spec=pltpu.PrefetchScalarGridSpec(
            num_scalar_prefetch=0,
            grid=(N, n_hw_blocks),
            in_specs=[
                pl.BlockSpec((1, C, tile_hw), lambda n, j: (n, 0, j)),
                pl.BlockSpec((1, 1, tile_hw), lambda n, j: (n, 0, j)),
            ],
            out_specs=pl.BlockSpec((1, 1, tile_hw), lambda n, j: (n, 0, 0)),
        ),
        compiler_params=pltpu.CompilerParams(
            dimension_semantics=("parallel", "arbitrary"),
            vmem_limit_bytes=32 * 1024 * 1024,
        ),
    )(x3, tgt)

    total = jnp.sum(partial)                   # tiny final reduction in XLA
    if size_average:
        total = total / jnp.float32(N * HW)
    return total


def _focal_loss_ref(x_nchw, target_nhw, *, gamma, alpha, size_average):
    """Pure-JAX reference mirroring the PyTorch module."""
    N, C, H, W = x_nchw.shape
    rows = x_nchw.reshape(N, C, H * W).transpose(0, 2, 1).reshape(-1, C)
    tgt = target_nhw.reshape(-1)
    logp = jax.nn.log_softmax(rows.astype(jnp.float32), axis=1)
    logpt = jnp.take_along_axis(logp, tgt[:, None], axis=1)[:, 0]
    pt = jnp.exp(logpt)
    if isinstance(alpha, (float, int)) and not isinstance(alpha, bool):
        a = jnp.array([alpha, 1.0 - alpha], jnp.float32)
    elif isinstance(alpha, (list, tuple)):
        a = jnp.array(alpha, jnp.float32)
    else:
        a = None
    if a is not None:
        logpt = logpt * a[tgt]
    loss = -jnp.power(1.0 - pt, gamma) * logpt
    return loss.mean() if size_average else loss.sum()


if __name__ == "__main__":
    key = jax.random.PRNGKey(0)

    configs = [
        # (N, C, H, W, gamma, alpha, size_average, tile_hw)
        (2, 4, 16, 16, 2.0, [0.25, 0.75, 0.5, 0.5], True, None),   # list alpha, int gamma
        (2, 4, 16, 16, 0.0, None, False, None),                    # plain NLL sum
        (2, 2, 17, 17, 1.5, 0.25, True, 128),                      # scalar alpha, frac gamma,
                                                                   # tail-masked tiles
    ]

    for idx, (N, C, H, W, gamma, alpha, size_average, thw) in enumerate(configs):
        kx, kt, key = jax.random.split(key, 3)
        x = jax.random.normal(kx, (N, C, H, W), dtype=jnp.float32)
        target = jax.random.randint(kt, (N, H, W), 0, C, dtype=jnp.int32)

        out = focal_loss(x, target, gamma=gamma, alpha=alpha,
                         size_average=size_average, tile_hw=thw)
        out = jax.block_until_ready(out)

        ref = _focal_loss_ref(x, target, gamma=gamma, alpha=alpha,
                              size_average=size_average)
        assert jnp.allclose(out, ref, rtol=1e-5, atol=1e-5), (idx, out, ref)

    print("KERNEL_OK")
</pallas_src>

<mosaic_0001>
module attributes {stable_mosaic.version = 11 : i64} {
  func.func @_focal_loss_kernel(%arg0: i32, %arg1: i32, %arg2: memref<1x4x256xf32, #tpu.memory_space<vmem>>, %arg3: memref<1x1x256xi32, #tpu.memory_space<vmem>>, %arg4: memref<1x1x256xf32, #tpu.memory_space<vmem>>) attributes {dimension_semantics = [#tpu.dimension_semantics<parallel>, #tpu.dimension_semantics<arbitrary>], iteration_bounds = array<i64: 2, 1>, scalar_prefetch = 0 : i64, scratch_operands = 0 : i64, tpu.core_type = #tpu.core_type<tc>, window_params = [{transform_indices = @transform_0, window_bounds = array<i64: 1, 4, 256>}, {transform_indices = @transform_1, window_bounds = array<i64: 1, 1, 256>}, {transform_indices = @transform_2, window_bounds = array<i64: 1, 1, 256>}]} {
    %c0_i32 = arith.constant 0 : i32
    %0 = arith.cmpi eq, %arg1, %c0_i32 : i32
    %1 = arith.extui %0 : i1 to i32
    %c0_i32_0 = arith.constant 0 : i32
    %2 = arith.cmpi ne, %1, %c0_i32_0 : i32
    scf.if %2 {
      %cst_24 = arith.constant 0.000000e+00 : f32
      %54 = vector.broadcast %cst_24 : f32 to vector<1x1x256xf32>
      %c0_25 = arith.constant 0 : index
      %c0_26 = arith.constant 0 : index
      %c0_27 = arith.constant 0 : index
      %55 = vector.load %arg4[%c0_25, %c0_26, %c0_27] : memref<1x1x256xf32, #tpu.memory_space<vmem>>, vector<1x1x256xf32>
      tpu.vector_store %arg4[%c0_25, %c0_26, %c0_27], %54 {strides = array<i32>} : memref<1x1x256xf32, #tpu.memory_space<vmem>>, vector<1x1x256xf32>,
    } else {
    }
    %c0 = arith.constant 0 : index
    %c0_1 = arith.constant 0 : index
    %c0_2 = arith.constant 0 : index
    %3 = vector.load %arg2[%c0, %c0_1, %c0_2] : memref<1x4x256xf32, #tpu.memory_space<vmem>>, vector<1x4x256xf32>
    %4 = vector.shape_cast %3 : vector<1x4x256xf32> to vector<4x256xf32>
    %c0_3 = arith.constant 0 : index
    %c0_4 = arith.constant 0 : index
    %c0_5 = arith.constant 0 : index
    %5 = vector.load %arg3[%c0_3, %c0_4, %c0_5] : memref<1x1x256xi32, #tpu.memory_space<vmem>>, vector<1x1x256xi32>
    %6 = vector.shape_cast %5 : vector<1x1x256xi32> to vector<1x256xi32>
    %cst = arith.constant dense<0xFF800000> : vector<256xf32>
    %7 = vector.multi_reduction <maximumf>, %4, %cst [0] : vector<4x256xf32> to vector<256xf32>
    %8 = vector.shape_cast %7 : vector<256xf32> to vector<1x256xf32>
    %9 = vector.broadcast %8 : vector<1x256xf32> to vector<4x256xf32>
    %10 = arith.subf %4, %9 : vector<4x256xf32>
    %11 = math.exp %10 : vector<4x256xf32>
    %cst_6 = arith.constant dense<0.000000e+00> : vector<256xf32>
    %12 = vector.multi_reduction <add>, %11, %cst_6 [0] : vector<4x256xf32> to vector<256xf32>
    %13 = vector.shape_cast %12 : vector<256xf32> to vector<1x256xf32>
    %14 = math.log %13 : vector<1x256xf32>
    %15 = tpu.iota {dimensions = array<i32: 0>} : vector<4x256xi32>
    %16 = vector.broadcast %6 : vector<1x256xi32> to vector<4x256xi32>
    %17 = arith.cmpi eq, %15, %16 : vector<4x256xi32>
    %cst_7 = arith.constant 0.000000e+00 : f32
    %18 = vector.broadcast %cst_7 : f32 to vector<4x256xf32>
    %19 = arith.select %17, %10, %18 : vector<4x256xi1>, vector<4x256xf32>
    %cst_8 = arith.constant dense<0.000000e+00> : vector<256xf32>
    %20 = vector.multi_reduction <add>, %19, %cst_8 [0] : vector<4x256xf32> to vector<256xf32>
    %21 = vector.shape_cast %20 : vector<256xf32> to vector<1x256xf32>
    %22 = arith.subf %21, %14 : vector<1x256xf32>
    %23 = math.exp %22 : vector<1x256xf32>
    %cst_9 = arith.constant 0.000000e+00 : f32
    %24 = vector.broadcast %cst_9 : f32 to vector<1x256xf32>
    %c0_i32_10 = arith.constant 0 : i32
    %25 = vector.broadcast %c0_i32_10 : i32 to vector<1x256xi32>
    %26 = arith.cmpi eq, %6, %25 : vector<1x256xi32>
    %cst_11 = arith.constant 2.500000e-01 : f32
    %27 = vector.broadcast %cst_11 : f32 to vector<1x256xf32>
    %28 = arith.select %26, %27, %24 : vector<1x256xi1>, vector<1x256xf32>
    %c1_i32 = arith.constant 1 : i32
    %29 = vector.broadcast %c1_i32 : i32 to vector<1x256xi32>
    %30 = arith.cmpi eq, %6, %29 : vector<1x256xi32>
    %cst_12 = arith.constant 7.500000e-01 : f32
    %31 = vector.broadcast %cst_12 : f32 to vector<1x256xf32>
    %32 = arith.select %30, %31, %28 : vector<1x256xi1>, vector<1x256xf32>
    %c2_i32 = arith.constant 2 : i32
    %33 = vector.broadcast %c2_i32 : i32 to vector<1x256xi32>
    %34 = arith.cmpi eq, %6, %33 : vector<1x256xi32>
    %cst_13 = arith.constant 5.000000e-01 : f32
    %35 = vector.broadcast %cst_13 : f32 to vector<1x256xf32>
    %36 = arith.select %34, %35, %32 : vector<1x256xi1>, vector<1x256xf32>
    %c3_i32 = arith.constant 3 : i32
    %37 = vector.broadcast %c3_i32 : i32 to vector<1x256xi32>
    %38 = arith.cmpi eq, %6, %37 : vector<1x256xi32>
    %cst_14 = arith.constant 5.000000e-01 : f32
    %39 = vector.broadcast %cst_14 : f32 to vector<1x256xf32>
    %40 = arith.select %38, %39, %36 : vector<1x256xi1>, vector<1x256xf32>
    %41 = arith.mulf %22, %40 : vector<1x256xf32>
    %cst_15 = arith.constant 1.000000e+00 : f32
    %42 = vector.broadcast %cst_15 : f32 to vector<1x256xf32>
    %43 = arith.subf %42, %23 : vector<1x256xf32>
    %cst_16 = arith.constant 0.000000e+00 : f32
    %44 = vector.broadcast %cst_16 : f32 to vector<1x256xf32>
    %45 = arith.maximumf %43, %44 : vector<1x256xf32>
    %46 = arith.mulf %45, %45 : vector<1x256xf32>
    %cst_17 = arith.constant 0.000000e+00 : f32
    %47 = vector.broadcast %cst_17 : f32 to vector<1x256xf32>
    %48 = arith.subf %47, %46 : vector<1x256xf32>
    %49 = arith.mulf %48, %41 : vector<1x256xf32>
    %c0_18 = arith.constant 0 : index
    %c0_19 = arith.constant 0 : index
    %c0_20 = arith.constant 0 : index
    %50 = vector.load %arg4[%c0_18, %c0_19, %c0_20] : memref<1x1x256xf32, #tpu.memory_space<vmem>>, vector<1x1x256xf32>
    %51 = vector.shape_cast %49 : vector<1x256xf32> to vector<1x1x256xf32>
    %52 = arith.addf %50, %51 : vector<1x1x256xf32>
    %c0_21 = arith.constant 0 : index
    %c0_22 = arith.constant 0 : index
    %c0_23 = arith.constant 0 : index
    %53 = vector.load %arg4[%c0_21, %c0_22, %c0_23] : memref<1x1x256xf32, #tpu.memory_space<vmem>>, vector<1x1x256xf32>
    tpu.vector_store %arg4[%c0_21, %c0_22, %c0_23], %52 {strides = array<i32>} : memref<1x1x256xf32, #tpu.memory_space<vmem>>, vector<1x1x256xf32>,
    return
  }
  func.func @transform_0(%arg0: i32, %arg1: i32) -> (i32, i32, i32) {
    %c0_i32 = arith.constant 0 : i32
    %c0_i32_0 = arith.constant 0 : i32
    return %arg0, %c0_i32, %arg1 : i32, i32, i32
  }
  func.func @transform_1(%arg0: i32, %arg1: i32) -> (i32, i32, i32) {
    %c0_i32 = arith.constant 0 : i32
    %c0_i32_0 = arith.constant 0 : i32
    return %arg0, %c0_i32, %arg1 : i32, i32, i32
  }
  func.func @transform_2(%arg0: i32, %arg1: i32) -> (i32, i32, i32) {
    %c0_i32 = arith.constant 0 : i32
    %c0_i32_0 = arith.constant 0 : i32
    %c0_i32_1 = arith.constant 0 : i32
    return %arg0, %c0_i32, %c0_i32_0 : i32, i32, i32
  }
}

</mosaic_0001>

<llo_original>
// kernel: tpu_custom_call.1
$region0: #{tpu_custom_call.1}
  #allocation0 [shape = 'u32[]', space=smem, size = 0x4, offset = 0x4, fixed_abs, tag = 'smem constant byte address 0x4 - core index']
  #allocation1 [shape = 'u32[144,128]{1,0:T(1,128)}', space=vmem, size = 0x12000, scoped, tag = 'internal scratch']
  %s0 = inlined_call_operand.hbm [shape: f32[2,4,256], index: 0, kind: input, shape index: {}]
  %s1 = inlined_call_operand.hbm [shape: s32[2,1,256], index: 1, kind: input, shape index: {}]
  %s2 = inlined_call_operand.hbm [shape: f32[2,1,256], index: 2, kind: output, shape index: {}]
  %s3 = sld [smem:[#allocation0]]
  $region53: #{tpu_custom_call.1} parent=0
    _
  %s5 = ssub.s32 1, %s3
  %s6 = scalar_select 0, %s5, %s3
  $region1: #{tpu_custom_call.1} parent=0
    #allocation2 [shape = 'u8[8192]{0}', space=vmem, size = 0x2000, scoped, tag = 'input window, operand 0']
    #allocation3 [shape = 's32[2]{0}', space=sflag, size = 0x8, scoped, tag = 'scoped memory for tpu_custom_call.1']
    #allocation4 [shape = 's32[2]{0}', space=sflag, size = 0x8, scoped, tag = 'scoped memory for tpu_custom_call.1']
    #allocation5 [shape = 'u8[2048]{0}', space=vmem, size = 0x800, scoped, tag = 'input window, operand 1']
    #allocation6 [shape = 's32[2]{0}', space=sflag, size = 0x8, scoped, tag = 'scoped memory for tpu_custom_call.1']
    #allocation7 [shape = 'u8[2048]{0}', space=vmem, size = 0x800, scoped, tag = 'output window, operand 0']
    %7 = vsyncpa [#allocation3], 0
    %s8 = scalar_lea.sflag [#allocation3], 1
    %9 = vsyncpa %s8, 0
    %10 = vsyncpa [#allocation6], 0
    %s11 = scalar_lea.sflag [#allocation6], 1
    %12 = vsyncpa %s11, 0
    %13 = vsyncpa [#allocation4], 0
    %s14 = scalar_lea.sflag [#allocation4], 1
    %15 = vsyncpa %s14, 0
    loop: start=0, step=1, limit=4
    $region2: #{tpu_custom_call.1} parent=1 // loop_pre_header
      _
    $region3: #{tpu_custom_call.1} parent=1 // loop_header
      %s17 = sphi 0, %s21
      %p18 = scmp.ge.s32.totalorder %s17, 4
      %s24 = sphi 0, %s36
      %s25 = sphi 0, %s32
      %s26 = sphi 0, %s24
      %s27 = sphi 0, %s25
      %s28 = sphi 0, %s26
      %s29 = sphi 0, %s27
      %s41 = sphi 0, %s43
      %s44 = sphi 0, %s41
      %s45 = sphi 0, %s44
      %s61 = sphi 0, %s45
      %s69 = sphi 0, %s71
      %s72 = sphi 0, %s69
      %s73 = sphi 0, %s72
      %s89 = sphi 0, %s73
      %s95 = sphi 0, %s97
      %s98 = sphi 0, %s95
      %s99 = sphi 0, %s98
      %s115 = sphi 0, %s99
    $region4: #{tpu_custom_call.1} parent=1 // loop_header_branch
      %20 = sbr.rel (%p18) target = $region8
    $region5: #{tpu_custom_call.1} parent=1 // loop_body
      %s22 = ssub.s32 %s17, 1
      %s23 = ssub.s32 %s17, 2
      %s30 = sadd.s32 1, %s25
      %p31 = scmp.ge.s32.totalorder %s30, 1
      %s32 = scalar_select %p31, 0, %s30
      %s33 = sadd.s32 1, %s24
      %s34 = scalar_select %p31, %s33, %s24
      %p35 = scmp.ge.s32.totalorder %s34, 2
      %s36 = scalar_select %p35, 0, %s34
      %s37 = ssub.s32 %s24, %s36
      %s38 = ssub.s32 %s25, %s32
      %s39 = sor.u32 %s37, %s38
      %p40 = scmp.eq.s32.totalorder %s39, 0
      %s42 = sadd.s32 %s41, 1
      %s43 = scalar_select %p40, %s41, %s42
      %p46 = pneg %p40
      %p47 = scmp.eq.s32.totalorder %s17, 1
      %p48 = por %p46, %p47
      %p49 = scmp.ne.s32.totalorder %s41, %s44
      %p50 = scmp.eq.s32.totalorder %s17, 0
      %p51 = por %p49, %p50
      %p52 = scmp.ne.s32.totalorder %s41, %s44
      %p53 = scmp.eq.s32.totalorder %s22, 1
      %p54 = por %p52, %p53
      %p55 = scmp.ne.s32.totalorder %s44, %s45
      %p56 = scmp.eq.s32.totalorder %s22, 0
      %p57 = por %p55, %p56
      %p58 = scmp.ne.s32.totalorder %s44, %s45
      %p59 = scmp.eq.s32.totalorder %s23, 1
      %p60 = por %p58, %p59
      %p62 = scmp.ne.s32.totalorder %s45, %s61
      %p63 = scmp.eq.s32.totalorder %s23, 0
      %p64 = por %p62, %p63
      %s65 = ssub.s32 %s24, %s36
      %s66 = ssub.s32 %s25, %s32
      %s67 = sor.u32 %s65, %s66
      %p68 = scmp.eq.s32.totalorder %s67, 0
      %s70 = sadd.s32 %s69, 1
      %s71 = scalar_select %p68, %s69, %s70
      %p74 = pneg %p68
      %p75 = scmp.eq.s32.totalorder %s17, 1
      %p76 = por %p74, %p75
      %p77 = scmp.ne.s32.totalorder %s69, %s72
      %p78 = scmp.eq.s32.totalorder %s17, 0
      %p79 = por %p77, %p78
      %p80 = scmp.ne.s32.totalorder %s69, %s72
      %p81 = scmp.eq.s32.totalorder %s22, 1
      %p82 = por %p80, %p81
      %p83 = scmp.ne.s32.totalorder %s72, %s73
      %p84 = scmp.eq.s32.totalorder %s22, 0
      %p85 = por %p83, %p84
      %p86 = scmp.ne.s32.totalorder %s72, %s73
      %p87 = scmp.eq.s32.totalorder %s23, 1
      %p88 = por %p86, %p87
      %p90 = scmp.ne.s32.totalorder %s73, %s89
      %p91 = scmp.eq.s32.totalorder %s23, 0
      %p92 = por %p90, %p91
      %s93 = ssub.s32 %s24, %s36
      %p94 = scmp.eq.s32.totalorder %s93, 0
      %s96 = sadd.s32 %s95, 1
      %s97 = scalar_select %p94, %s95, %s96
      %p100 = pneg %p94
      %p101 = scmp.eq.s32.totalorder %s17, 1
      %p102 = por %p100, %p101
      %p103 = scmp.ne.s32.totalorder %s95, %s98
      %p104 = scmp.eq.s32.totalorder %s17, 0
      %p105 = por %p103, %p104
      %p106 = scmp.ne.s32.totalorder %s95, %s98
      %p107 = scmp.eq.s32.totalorder %s22, 1
      %p108 = por %p106, %p107
      %p109 = scmp.ne.s32.totalorder %s98, %s99
      %p110 = scmp.eq.s32.totalorder %s22, 0
      %p111 = por %p109, %p110
      %p112 = scmp.ne.s32.totalorder %s98, %s99
      %p113 = scmp.eq.s32.totalorder %s23, 1
      %p114 = por %p112, %p113
      %p116 = scmp.ne.s32.totalorder %s99, %s115
      %p117 = scmp.eq.s32.totalorder %s23, 0
      %p118 = por %p116, %p117
      %p119 = scmp.le.s32.totalorder 1, %s17
      %p120 = scmp.lt.s32.totalorder %s17, 3
      %p121 = pnand %p119, %p120
      %p122 = pneg %p121
      // Predicated region
      $region9: #{tpu_custom_call.1} parent=5 // pred_check
        _
      $region10: #{tpu_custom_call.1} parent=5 // pred_check_branch
        %124 = sbr.rel (%p121) target = $region12
      $region11: #{tpu_custom_call.1} parent=5 // pred_region
        %s125 = ssub.s32 %s17, 1
      $region12: #{tpu_custom_call.1} parent=5 // pred_fallthru
        _
      %p126 = scmp.lt.s32.totalorder %s17, 2
      // Predicated region
      $region13: #{tpu_custom_call.1} parent=5 // pred_check
        %p127 = pneg %p126
      $region14: #{tpu_custom_call.1} parent=5 // pred_check_branch
        %129 = sbr.rel (%p127) target = $region16
      $region15: #{tpu_custom_call.1} parent=5 // pred_region
        // Predicated region
        $region17: #{tpu_custom_call.1} parent=15 // pred_check
          %p130 = pneg %p51
        $region18: #{tpu_custom_call.1} parent=15 // pred_check_branch
          %132 = sbr.rel (%p130) target = $region20
        $region19: #{tpu_custom_call.1} parent=15 // pred_region
          %s133 = sand.u32 %s41, 1
          %s134 = scalar_lea.sflag [#allocation3], %s133
          %s135 = sand.u32 %s41, 1
          %s136 = smul.addr %s135, 8
          %s137 = scalar_lea.vmem [#allocation2], %s136
          %s138 = smul.u32 2, %s25
          %s140 = ssub.s32 128, 128
          %141 = vsyncadd %s134, %s140
          %s142 = smul.addr %s24, 2
          %s143 = sadd.s32 %s138, %s142
          %s144 = smul.addr %s143, 64
          %s145 = scalar_lea.hbm %s0, %s144
          %s147 = sshll.u32 %s137, 4
          %s148 = int_to_ptr.vmem [resolvable:$true] %s147
          %150 = dma.hbm_to_vmem [thread:$0]  %s145, 128, %s148, %s134
        $region20: #{tpu_custom_call.1} parent=15 // pred_fallthru
          _
        // Predicated region
        $region21: #{tpu_custom_call.1} parent=15 // pred_check
          %p151 = pneg %p79
        $region22: #{tpu_custom_call.1} parent=15 // pred_check_branch
          %153 = sbr.rel (%p151) target = $region24
        $region23: #{tpu_custom_call.1} parent=15 // pred_region
          %s154 = sand.u32 %s69, 1
          %s155 = scalar_lea.sflag [#allocation6], %s154
          %s156 = sand.u32 %s69, 1
          %s157 = smul.addr %s156, 2
          %s158 = scalar_lea.vmem [#allocation5], %s157
          %s159 = smul.u32 2, %s25
          %s161 = ssub.s32 32, 32
          %162 = vsyncadd %s155, %s161
          %s163 = smul.addr %s24, 2
          %s164 = sadd.s32 %s159, %s163
          %s165 = smul.addr %s164, 16
          %s166 = scalar_lea.hbm %s1, %s165
          %s168 = sshll.u32 %s158, 4
          %s169 = int_to_ptr.vmem [resolvable:$true] %s168
          %171 = dma.hbm_to_vmem [thread:$0]  %s166, 32, %s169, %s155
        $region24: #{tpu_custom_call.1} parent=15 // pred_fallthru
          _
      $region16: #{tpu_custom_call.1} parent=5 // pred_fallthru
        _
      %p172 = scmp.le.s32.totalorder 1, %s17
      %p173 = scmp.lt.s32.totalorder %s17, 3
      %p174 = pnand %p172, %p173
      %p175 = pneg %p174
      // Predicated region
      $region25: #{tpu_custom_call.1} parent=5 // pred_check
        _
      $region26: #{tpu_custom_call.1} parent=5 // pred_check_branch
        %177 = sbr.rel (%p174) target = $region28
      $region27: #{tpu_custom_call.1} parent=5 // pred_region
        %s178 = ssub.s32 %s17, 1
        %s179 = sand.u32 %s44, 1
        %s180 = scalar_lea.sflag [#allocation3], %s179
        %s181 = sand.u32 %s44, 1
        %s182 = smul.addr %s181, 8
        %s183 = scalar_lea.vmem [#allocation2], %s182
        // Predicated region
        $region29: #{tpu_custom_call.1} parent=27 // pred_check
          %p184 = pneg %p57
        $region30: #{tpu_custom_call.1} parent=27 // pred_check_branch
          %186 = sbr.rel (%p184) target = $region32
        $region31: #{tpu_custom_call.1} parent=27 // pred_region
          %187 = dma.done %s180, 128
        $region32: #{tpu_custom_call.1} parent=27 // pred_fallthru
          _
        %s188 = sand.u32 %s72, 1
        %s189 = scalar_lea.sflag [#allocation6], %s188
        %s190 = sand.u32 %s72, 1
        %s191 = smul.addr %s190, 2
        %s192 = scalar_lea.vmem [#allocation5], %s191
        // Predicated region
        $region33: #{tpu_custom_call.1} parent=27 // pred_check
          %p193 = pneg %p85
        $region34: #{tpu_custom_call.1} parent=27 // pred_check_branch
          %195 = sbr.rel (%p193) target = $region36
        $region35: #{tpu_custom_call.1} parent=27 // pred_region
          %196 = dma.done %s189, 32
        $region36: #{tpu_custom_call.1} parent=27 // pred_fallthru
          _
        %s197 = sand.u32 %s44, 1
        %s198 = scalar_lea.sflag [#allocation3], %s197
        %s199 = sand.u32 %s44, 1
        %s200 = smul.addr %s199, 8
        %s201 = scalar_lea.vmem [#allocation2], %s200
        %p202 = pneg %p57
        %p203 = pneg %p54
        %s204 = sand.u32 %s72, 1
        %s205 = scalar_lea.sflag [#allocation6], %s204
        %s206 = sand.u32 %s72, 1
        %s207 = smul.addr %s206, 2
        %s208 = scalar_lea.vmem [#allocation5], %s207
        %p209 = pneg %p85
        %p210 = pneg %p82
        %p211 = pneg %p111
        %p212 = pneg %p108
        %s213 = sand.u32 %s98, 1
        %s214 = scalar_lea.sflag [#allocation4], %s213
        %s215 = sand.u32 %s98, 1
        %s216 = smul.addr %s215, 2
        %s217 = scalar_lea.vmem [#allocation7], %s216
        %s218 = smul.u32 2, %s27
        %s219 = smul.u32 2, %s27
        %p220 = scmp.eq.s32.totalorder %s27, 0
        // Predicated region
        $region37: #{tpu_custom_call.1} parent=27 // pred_check
          %p221 = pneg %p220
        $region38: #{tpu_custom_call.1} parent=27 // pred_check_branch
          %223 = sbr.rel (%p221) target = $region40
        $region39: #{tpu_custom_call.1} parent=27 // pred_region
          %v224 = vlaneseq
          %vm225 = vcmp.ge.s32.totalorder %v224, 0
          %vm226 = vcmp.lt.s32.totalorder %v224, 256
          %vm227 = vmand %vm225, %vm226
          %228 = vst.msk [vmem:[%s217] sm:$0x3] %vm227, 0.0
        $region40: #{tpu_custom_call.1} parent=27 // pred_fallthru
          _
        %v229 = vld [vmem:[%s183] sm:$0xff]
        %v230 = vld [vmem:[%s192] sm:$0x3]
        %v232 = vcombine.high %v229, %v229
        %vm234 = vcmask 1043456
        %v235 = vsel %vm234, %v229, -inf
        %v236 = vrot.slane %v235, 4
        %v237 = vmax.f32 %v235, %v236
        %v238 = vrot.slane %v237, 2
        %v239 = vmax.f32 %v237, %v238
        %v240 = vrot.slane %v239, 1
        %v241 = vmax.f32 %v239, %v240
        %v242 = vsel %vm234, %v232, -inf
        %v243 = vrot.slane %v242, 4
        %v244 = vmax.f32 %v242, %v243
        %v245 = vrot.slane %v244, 2
        %v246 = vmax.f32 %v244, %v245
        %v247 = vrot.slane %v246, 1
        %v248 = vmax.f32 %v246, %v247
        %v251 = vcombine.low %v241, %v248
        %v253 = vsub.f32 %v229, %v251
        %v254 = vmul.f32 %v253, 1.442695
        %v255 = vpow.pop %v254
        %v257 = vcombine.high %v255, %v255
        %v259 = vsel %vm234, %v255, 0.0
        %v260 = vrot.slane %v259, 4
        %v261 = vadd.f32 %v259, %v260
        %v262 = vrot.slane %v261, 2
        %v263 = vadd.f32 %v261, %v262
        %v264 = vrot.slane %v263, 1
        %v265 = vadd.f32 %v263, %v264
        %v266 = vsel %vm234, %v257, 0.0
        %v267 = vrot.slane %v266, 4
        %v268 = vadd.f32 %v266, %v267
        %v269 = vrot.slane %v268, 2
        %v270 = vadd.f32 %v268, %v269
        %v271 = vrot.slane %v270, 1
        %v272 = vadd.f32 %v270, %v271
        %v273 = vlog2.pop %v265
        %v274 = vmul.f32 %v273, 0.6931472
        %v275 = vlog2.pop %v272
        %v276 = vmul.f32 %v275, 0.6931472
        %v277 = vlaneseq
        %v278 = vshrl.u32 %v277, 7
        %v279 = vlaneseq
        %v280 = vshrl.u32 %v279, 7
        %v281 = vsub.s32 0, %v280
        %v282 = vrot.slane %v230, %v281
        %v283 = vlaneseq
        %v284 = vshrl.u32 %v283, 7
        %v285 = vsub.s32 1, %v284
        %v286 = vrot.slane %v230, %v285
        %vm287 = vcmp.eq.s32.totalorder %v278, %v282
        %vm288 = vcmp.eq.s32.totalorder %v278, %v286
        %v290 = vcombine.high %v253, %v253
        %v292 = vsel %vm287, %v253, 0.0
        %v293 = vsel %vm288, %v290, 0.0
        %v294 = vsel %vm234, %v292, 0.0
        %v295 = vrot.slane %v294, 4
        %v296 = vadd.f32 %v294, %v295
        %v297 = vrot.slane %v296, 2
        %v298 = vadd.f32 %v296, %v297
        %v299 = vrot.slane %v298, 1
        %v300 = vadd.f32 %v298, %v299
        %v301 = vsel %vm234, %v293, 0.0
        %v302 = vrot.slane %v301, 4
        %v303 = vadd.f32 %v301, %v302
        %v304 = vrot.slane %v303, 2
        %v305 = vadd.f32 %v303, %v304
        %v306 = vrot.slane %v305, 1
        %v307 = vadd.f32 %v305, %v306
        %v308 = vsub.f32 %v300, %v274
        %v309 = vsub.f32 %v307, %v276
        %v310 = vmul.f32 %v308, 1.442695
        %v311 = vpow.pop %v310
        %v312 = vmul.f32 %v309, 1.442695
        %v313 = vpow.pop %v312
        %vm314 = vcmp.eq.s32.totalorder %v230, 0
        %v315 = vsel %vm314, 0.25, 0.0
        %vm316 = vcmp.eq.s32.totalorder %v230, 1
        %v317 = vsel %vm316, 0.75, %v315
        %vm318 = vcmp.eq.s32.totalorder %v230, 2
        %v319 = vsel %vm318, 0.5, %v317
        %vm320 = vcmp.eq.s32.totalorder %v230, 3
        %v321 = vsel %vm320, 0.5, %v319
        %v323 = vlaneseq
        %v324 = vshrl.u32 %v323, 7
        %v325 = vsub.s32 0, %v324
        %v326 = vrot.slane %v321, %v325
        %v327 = vlaneseq
        %v328 = vshrl.u32 %v327, 7
        %v329 = vsub.s32 1, %v328
        %v330 = vrot.slane %v321, %v329
        %v333 = vmul.f32 %v308, %v326
        %v334 = vmul.f32 %v309, %v330
        %v335 = vsub.f32 1.0, %v311
        %v336 = vsub.f32 1.0, %v313
        %v337 = vmax.f32 %v335, 0.0
        %v338 = vmax.f32 %v336, 0.0
        %v339 = vmul.f32 %v337, %v337
        %v340 = vmul.f32 %v338, %v338
        %v341 = vsub.f32 0.0, %v339
        %v342 = vsub.f32 0.0, %v340
        %v343 = vmul.f32 %v341, %v333
        %v344 = vmul.f32 %v342, %v334
        %v345 = vld [vmem:[%s217] sm:$0x3]
        %v348 = vcombine.low %v343, %v344
        %v350 = vunpack.c.l.s4 1966171168
        %v351 = vunpack.c.0.s8 %v350
        %v352 = vlaneseq
        %v353 = vshrl.u32 %v352, 7
        %v354 = vsub.s32 %v351, %v353
        %v355 = vrot.slane %v348, %v354
        %v357 = vunpack.c.l.s4 1966171168
        %v358 = vunpack.c.0.s8 %v357
        %v359 = vlaneseq
        %v360 = vshrl.u32 %v359, 7
        %v361 = vsub.s32 %v358, %v360
        %v362 = vrot.slane %v355, %v361
        %v364 = vadd.f32 %v345, %v362
        %v365 = vlaneseq
        %vm366 = vcmp.ge.s32.totalorder %v365, 0
        %vm367 = vcmp.lt.s32.totalorder %v365, 256
        %vm368 = vmand %vm366, %vm367
        %369 = vst.msk [vmem:[%s217] sm:$0x3] %vm368, %v364
        %s370 = sand.u32 %s98, 1
        %s371 = scalar_lea.sflag [#allocation4], %s370
        %s372 = sand.u32 %s98, 1
        %s373 = smul.addr %s372, 2
        %s374 = scalar_lea.vmem [#allocation7], %s373
        // Predicated region
        $region41: #{tpu_custom_call.1} parent=27 // pred_check
          %p375 = pneg %p108
        $region42: #{tpu_custom_call.1} parent=27 // pred_check_branch
          %377 = sbr.rel (%p375) target = $region44
        $region43: #{tpu_custom_call.1} parent=27 // pred_region
          %s379 = ssub.s32 32, 32
          %380 = vsyncadd %s371, %s379
          %s381 = smul.addr %s26, 2
          %s382 = smul.addr %s381, 16
          %s383 = scalar_lea.hbm %s2, %s382
          %s385 = sshll.u32 %s374, 4
          %s386 = int_to_ptr.vmem [resolvable:$true] %s385
          %388 = dma.vmem_to_hbm [thread:$0]  %s386, 32, %s383, %s371
        $region44: #{tpu_custom_call.1} parent=27 // pred_fallthru
          _
      $region28: #{tpu_custom_call.1} parent=5 // pred_fallthru
        _
      %p389 = scmp.le.s32.totalorder 2, %s17
      // Predicated region
      $region45: #{tpu_custom_call.1} parent=5 // pred_check
        %p390 = pneg %p389
      $region46: #{tpu_custom_call.1} parent=5 // pred_check_branch
        %392 = sbr.rel (%p390) target = $region48
      $region47: #{tpu_custom_call.1} parent=5 // pred_region
        %s393 = ssub.s32 %s17, 2
        // Predicated region
        $region49: #{tpu_custom_call.1} parent=47 // pred_check
          %p394 = pneg %p114
        $region50: #{tpu_custom_call.1} parent=47 // pred_check_branch
          %396 = sbr.rel (%p394) target = $region52
        $region51: #{tpu_custom_call.1} parent=47 // pred_region
          %s397 = sand.u32 %s99, 1
          %s398 = scalar_lea.sflag [#allocation4], %s397
          %s399 = sand.u32 %s99, 1
          %s400 = smul.addr %s399, 2
          %s401 = scalar_lea.vmem [#allocation7], %s400
          %402 = dma.done %s398, 32
        $region52: #{tpu_custom_call.1} parent=47 // pred_fallthru
          _
      $region48: #{tpu_custom_call.1} parent=5 // pred_fallthru
        _
    $region6: #{tpu_custom_call.1} parent=1 // loop_footer
      %s21 = sadd.s32 1, %s17
    $region7: #{tpu_custom_call.1} parent=1 // loop_footer_branch
      %16 = sbr.rel target = $region3
    $region8: #{tpu_custom_call.1} parent=1 // loop_exit
      _
    %403 = vsyncpa [#allocation3], 1
    %s404 = scalar_lea.sflag [#allocation3], 1
    %405 = vsyncpa %s404, 1
    %406 = vsyncpa [#allocation6], 1
    %s407 = scalar_lea.sflag [#allocation6], 1
    %408 = vsyncpa %s407, 1
    %409 = vsyncpa [#allocation4], 1
    %s410 = scalar_lea.sflag [#allocation4], 1
    %411 = vsyncpa %s410, 1

</llo_original>
